<compile_context>
chip_gen: v6e
topology: v6e:2x2x1
jax: 0.10.0
libtpu: 0.0.40
codegen_flags: <defaults>
</compile_context>

<pallas_src>
import jax
import jax.numpy as jnp
from jax.experimental import pallas as pl
from jax.experimental.pallas import tpu as pltpu


def gcn_kernel(x_ref, w1t_ref, b1_ref, w2_ref, o_ref):
    # x_ref:   (B, S, N)  full input
    # w1t_ref: (N, N)     conv1 weight, pre-transposed (in_node, out_node)
    # b1_ref:  (1, N)     conv1 bias
    # w2_ref:  (S, S)     conv2 weight (out_state, in_state)
    # o_ref:   (B, S, N)  output, written directly in model layout
    B, S, N = x_ref.shape

    # ---- conv1 (contract node axis) as one 2-D matmul ----------------------
    # Merging the leading (B,S) dims is a free row-major view (last dim stays
    # last, split/merge on a sublane-tile boundary) - no relayout.
    x2d = x_ref[...].reshape(B * S, N)
    h = jnp.dot(x2d, w1t_ref[...], preferred_element_type=jnp.float32)
    h = h + b1_ref[...]                      # bias over nodes
    h = h + x2d                              # residual
    h = jnp.where(h >= 0, h, 0.2 * h)        # LeakyReLU(0.2)

    # ---- conv2 (contract state axis) -----------------------------------
    # Per-batch (S,S)@(S,N) dots; each result is stored straight into its
    # (S,N) slice of the (B,S,N) output.  Static slices at multiples of S
    # (a multiple of 8) cost nothing; no transposes anywhere.
    w2 = w2_ref[...]
    for b in range(B):                       # B is a small trace-time constant
        h_b = h[b * S:(b + 1) * S, :]        # (S, N), free static slice
        o_ref[b] = jnp.dot(
            w2, h_b, preferred_element_type=jnp.float32).astype(o_ref.dtype)


def gcn_prepare_params(w1, b1, w2):
    """One-time parameter prep (init time, NOT per forward)."""
    w1t = jnp.transpose(w1)          # (N_in, N_out) for a transpose-free dot
    b1_2d = b1.reshape(1, -1)        # (1, N) for a clean 2-D broadcast add
    return w1t, b1_2d, w2


@jax.jit
def gcn_forward(x, w1t, b1_2d, w2):
    B, S, N = x.shape

    flops = 2 * B * (S * N * N + S * S * N)
    bytes_accessed = (2 * B * S * N + N * N + N + S * S) * 4

    vmem = pl.BlockSpec(memory_space=pltpu.MemorySpace.VMEM)

    return pl.pallas_call(
        gcn_kernel,
        out_shape=jax.ShapeDtypeStruct((B, S, N), x.dtype),
        in_specs=[vmem, vmem, vmem, vmem],
        out_specs=vmem,
        cost_estimate=pl.CostEstimate(
            flops=flops, transcendentals=0, bytes_accessed=bytes_accessed),
    )(x, w1t, b1_2d, w2)


def gcn_reference(x, w1, b1, w2):
    # Pure-JAX reference mirroring the PyTorch forward.
    h = jnp.einsum('bsn,mn->bsm', x, w1) + b1[None, None, :]   # conv1
    h = h + x
    h = jnp.where(h >= 0, h, 0.2 * h)                          # LeakyReLU(0.2)
    return jnp.einsum('os,bsn->bon', w2, h)                    # conv2 (no bias)


if __name__ == "__main__":
    B = 2
    num_state = 32   # S
    num_node = 16    # N

    key = jax.random.PRNGKey(0)
    kx, kw1, kb1, kw2 = jax.random.split(key, 4)

    x = jax.random.normal(kx, (B, num_state, num_node), dtype=jnp.float32)
    # Conv1d(num_node, num_node, k=1) weight: (N, N, 1) squeezed to (N, N)
    w1 = jax.random.normal(kw1, (num_node, num_node), dtype=jnp.float32) * 0.1
    b1 = jax.random.normal(kb1, (num_node,), dtype=jnp.float32) * 0.1
    # Conv1d(num_state, num_state, k=1, bias=False) weight: (S, S)
    w2 = jax.random.normal(kw2, (num_state, num_state), dtype=jnp.float32) * 0.1

    # Init-time parameter prep (done once, outside the forward).
    w1t, b1_2d, w2p = gcn_prepare_params(w1, b1, w2)

    out = gcn_forward(x, w1t, b1_2d, w2p)
    out = jax.block_until_ready(out)

    ref = gcn_reference(x, w1, b1, w2)
    assert out.shape == (B, num_state, num_node)
    assert jnp.allclose(out, ref, atol=1e-5, rtol=1e-5), "mismatch vs reference"

    print("KERNEL_OK")
</pallas_src>

<mosaic_0001>
module attributes {stable_mosaic.version = 11 : i64} {
  func.func @gcn_kernel(%arg0: memref<2x32x16xf32, #tpu.memory_space<vmem>>, %arg1: memref<16x16xf32, #tpu.memory_space<vmem>>, %arg2: memref<1x16xf32, #tpu.memory_space<vmem>>, %arg3: memref<32x32xf32, #tpu.memory_space<vmem>>, %arg4: memref<2x32x16xf32, #tpu.memory_space<vmem>>) attributes {dimension_semantics = [], scalar_prefetch = 0 : i64, scratch_operands = 0 : i64, tpu.core_type = #tpu.core_type<tc>} {
    %c0 = arith.constant 0 : index
    %c0_0 = arith.constant 0 : index
    %c0_1 = arith.constant 0 : index
    %0 = vector.load %arg0[%c0, %c0_0, %c0_1] : memref<2x32x16xf32, #tpu.memory_space<vmem>>, vector<2x32x16xf32>
    %1 = vector.shape_cast %0 : vector<2x32x16xf32> to vector<64x16xf32>
    %c0_2 = arith.constant 0 : index
    %c0_3 = arith.constant 0 : index
    %2 = vector.load %arg1[%c0_2, %c0_3] : memref<16x16xf32, #tpu.memory_space<vmem>>, vector<16x16xf32>
    %cst = arith.constant dense<0.000000e+00> : vector<64x16xf32>
    %3 = tpu.matmul %1, %2, %cst {dimension_numbers = #tpu.dot_dimension_numbers<[1], [0], [0], [1], [0, 0, 1, 1], [], []>} : vector<64x16xf32>, vector<16x16xf32>, vector<64x16xf32> -> vector<64x16xf32>
    %c0_4 = arith.constant 0 : index
    %c0_5 = arith.constant 0 : index
    %4 = vector.load %arg2[%c0_4, %c0_5] : memref<1x16xf32, #tpu.memory_space<vmem>>, vector<1x16xf32>
    %5 = vector.broadcast %4 : vector<1x16xf32> to vector<64x16xf32>
    %6 = arith.addf %3, %5 : vector<64x16xf32>
    %7 = arith.addf %6, %1 : vector<64x16xf32>
    %cst_6 = arith.constant 0.000000e+00 : f32
    %8 = vector.broadcast %cst_6 : f32 to vector<64x16xf32>
    %9 = arith.cmpf oge, %7, %8 : vector<64x16xf32>
    %cst_7 = arith.constant 2.000000e-01 : f32
    %10 = vector.broadcast %cst_7 : f32 to vector<64x16xf32>
    %11 = arith.mulf %10, %7 : vector<64x16xf32>
    %12 = arith.select %9, %7, %11 : vector<64x16xi1>, vector<64x16xf32>
    %c0_8 = arith.constant 0 : index
    %c0_9 = arith.constant 0 : index
    %13 = vector.load %arg3[%c0_8, %c0_9] : memref<32x32xf32, #tpu.memory_space<vmem>>, vector<32x32xf32>
    %14 = vector.extract_strided_slice %12 {offsets = [0, 0], sizes = [32, 16], strides = [1, 1]} : vector<64x16xf32> to vector<32x16xf32>
    %cst_10 = arith.constant dense<0.000000e+00> : vector<32x16xf32>
    %15 = tpu.matmul %13, %14, %cst_10 {dimension_numbers = #tpu.dot_dimension_numbers<[1], [0], [0], [1], [0, 0, 1, 1], [], []>} : vector<32x32xf32>, vector<32x16xf32>, vector<32x16xf32> -> vector<32x16xf32>
    %c0_11 = arith.constant 0 : index
    %c0_12 = arith.constant 0 : index
    %c0_13 = arith.constant 0 : index
    %16 = vector.load %arg4[%c0_11, %c0_12, %c0_13] : memref<2x32x16xf32, #tpu.memory_space<vmem>>, vector<1x32x16xf32>
    %17 = vector.shape_cast %16 : vector<1x32x16xf32> to vector<32x16xf32>
    %18 = vector.shape_cast %15 : vector<32x16xf32> to vector<1x32x16xf32>
    tpu.vector_store %arg4[%c0_11, %c0_12, %c0_13], %18 {strides = array<i32>} : memref<2x32x16xf32, #tpu.memory_space<vmem>>, vector<1x32x16xf32>,
    %19 = vector.extract_strided_slice %12 {offsets = [32, 0], sizes = [32, 16], strides = [1, 1]} : vector<64x16xf32> to vector<32x16xf32>
    %cst_14 = arith.constant dense<0.000000e+00> : vector<32x16xf32>
    %20 = tpu.matmul %13, %19, %cst_14 {dimension_numbers = #tpu.dot_dimension_numbers<[1], [0], [0], [1], [0, 0, 1, 1], [], []>} : vector<32x32xf32>, vector<32x16xf32>, vector<32x16xf32> -> vector<32x16xf32>
    %c1 = arith.constant 1 : index
    %c0_15 = arith.constant 0 : index
    %c0_16 = arith.constant 0 : index
    %21 = vector.load %arg4[%c1, %c0_15, %c0_16] : memref<2x32x16xf32, #tpu.memory_space<vmem>>, vector<1x32x16xf32>
    %22 = vector.shape_cast %21 : vector<1x32x16xf32> to vector<32x16xf32>
    %23 = vector.shape_cast %20 : vector<32x16xf32> to vector<1x32x16xf32>
    tpu.vector_store %arg4[%c1, %c0_15, %c0_16], %23 {strides = array<i32>} : memref<2x32x16xf32, #tpu.memory_space<vmem>>, vector<1x32x16xf32>,
    return
  }
}

</mosaic_0001>

<llo_original>
// kernel: gcn_forward.1
$region0: #{gcn_forward.1}
  #allocation0 [shape = 'u32[]', space=smem, size = 0x4, offset = 0x4, fixed_abs, tag = 'smem constant byte address 0x4 - core index']
  #allocation1 [shape = 'u32[144,128]{1,0:T(1,128)}', space=vmem, size = 0x12000, scoped, tag = 'internal scratch']
  %s0 = inlined_call_operand.vmem [shape: f32[2,32,16], index: 0, kind: input, shape index: {}]
  %s1 = inlined_call_operand.vmem [shape: f32[16,16], index: 1, kind: input, shape index: {}]
  %s2 = inlined_call_operand.vmem [shape: f32[1,16], index: 2, kind: input, shape index: {}]
  %s3 = inlined_call_operand.vmem [shape: f32[32,32], index: 3, kind: input, shape index: {}]
  %s4 = inlined_call_operand.vmem [shape: f32[2,32,16], index: 4, kind: output, shape index: {}]
  %s5 = sld [smem:[#allocation0]]
  $region26: #{gcn_forward.1} parent=0
    _
  %s7 = ssub.s32 1, %s5
  %s8 = scalar_select 0, %s7, %s5
  // Predicated region
  $region2: #{gcn_forward.1} parent=0 // pred_check
    _
  $region3: #{gcn_forward.1} parent=0 // pred_check_branch
    %10 = sbr.rel (0) target = $region5
  $region4: #{gcn_forward.1} parent=0 // pred_region
    _
  $region5: #{gcn_forward.1} parent=0 // pred_fallthru
    _
  // Predicated region
  $region6: #{gcn_forward.1} parent=0 // pred_check
    _
  $region7: #{gcn_forward.1} parent=0 // pred_check_branch
    %12 = sbr.rel (0) target = $region9
  $region8: #{gcn_forward.1} parent=0 // pred_region
    _
  $region9: #{gcn_forward.1} parent=0 // pred_fallthru
    _
  // Predicated region
  $region10: #{gcn_forward.1} parent=0 // pred_check
    _
  $region11: #{gcn_forward.1} parent=0 // pred_check_branch
    %14 = sbr.rel (0) target = $region13
  $region12: #{gcn_forward.1} parent=0 // pred_region
    _
  $region13: #{gcn_forward.1} parent=0 // pred_fallthru
    _
  // Predicated region
  $region14: #{gcn_forward.1} parent=0 // pred_check
    _
  $region15: #{gcn_forward.1} parent=0 // pred_check_branch
    %16 = sbr.rel (0) target = $region17
  $region16: #{gcn_forward.1} parent=0 // pred_region
    _
  $region17: #{gcn_forward.1} parent=0 // pred_fallthru
    _
  %v17 = vld [vmem:[%s0] sm:$0xff]
  %v18 = vld [vmem:[%s0 + $0x8] sm:$0xff]
  %v19 = vld [vmem:[%s0 + $0x10] sm:$0xff]
  %v20 = vld [vmem:[%s0 + $0x18] sm:$0xff]
  %v21 = vld [vmem:[%s0 + $0x20] sm:$0xff]
  %v22 = vld [vmem:[%s0 + $0x28] sm:$0xff]
  %v23 = vld [vmem:[%s0 + $0x30] sm:$0xff]
  %v24 = vld [vmem:[%s0 + $0x38] sm:$0xff]
  %v25 = vld [vmem:[%s1] sm:$0xff]
  %v26 = vld [vmem:[%s1 + $0x8] sm:$0xff]
  %v27 = vld [vmem:[%s2] sm:$0x1]
  %v29 = vlaneseq
  %v30 = vshrl.u32 %v29, 7
  %v31 = vsub.s32 0, %v30
  %v32 = vrot.slane %v27, %v31
  %vm34 = vcmask 130048
  %v36 = vsel %vm34, %v17, 0
  %v39 = vsel %vm34, %v18, 0
  %v42 = vsel %vm34, %v19, 0
  %v45 = vsel %vm34, %v20, 0
  %v48 = vsel %vm34, %v21, 0
  %v51 = vsel %vm34, %v22, 0
  %v54 = vsel %vm34, %v23, 0
  %v57 = vsel %vm34, %v24, 0
  %59 = vmatprep.subr.mxu0 0.0
  %60 = vmatpush1.msra.mxu0 0.0
  %61 = vmatprep.subr.mxu0 0.0
  %62 = vmatpush1.msra.mxu0 0.0
  %63 = vmatprep.subr.mxu0 0.0
  %64 = vmatpush1.msra.mxu0 0.0
  %65 = vmatprep.subr.mxu0 0.0
  %66 = vmatpush1.msra.mxu0 0.0
  %67 = vmatprep.subr.mxu0 0.0
  %68 = vmatpush1.msra.mxu0 0.0
  %69 = vmatprep.subr.mxu0 0.0
  %70 = vmatpush1.msra.mxu0 0.0
  %71 = vmatprep.subr.mxu0 0.0
  %72 = vmatpush1.msra.mxu0 0.0
  %73 = vmatprep.subr.mxu0 0.0
  %74 = vmatpush1.msra.mxu0 0.0
  %75 = vmatprep.subr.mxu0 0.0
  %76 = vmatpush1.msra.mxu0 0.0
  %77 = vmatprep.subr.mxu0 0.0
  %78 = vmatpush1.msra.mxu0 0.0
  %79 = vmatprep.subr.mxu0 0.0
  %80 = vmatpush1.msra.mxu0 0.0
  %81 = vmatprep.subr.mxu0 0.0
  %82 = vmatpush1.msra.mxu0 0.0
  %83 = vmatprep.subr.mxu0 0.0
  %84 = vmatpush1.msra.mxu0 0.0
  %85 = vmatprep.subr.mxu0 0.0
  %86 = vmatpush1.msra.mxu0 0.0
  %87 = vmatprep.subr.mxu0 0.0
  %88 = vmatpush1.msra.mxu0 %v26
  %89 = vmatprep.subr.mxu0 0.0
  %90 = vmatpush1.msra.mxu0 %v25
  %91 = vmatprep.subr.mxu0 0.0
  %92 = vmatpush2.msra.mxu0 0.0
  %93 = vmatprep.subr.mxu0 0.0
  %94 = vmatpush2.msra.mxu0 0.0
  %95 = vmatprep.subr.mxu0 0.0
  %96 = vmatpush2.msra.mxu0 0.0
  %97 = vmatprep.subr.mxu0 0.0
  %98 = vmatpush2.msra.mxu0 0.0
  %99 = vmatprep.subr.mxu0 0.0
  %100 = vmatpush2.msra.mxu0 0.0
  %101 = vmatprep.subr.mxu0 0.0
  %102 = vmatpush2.msra.mxu0 0.0
  %103 = vmatprep.subr.mxu0 0.0
  %104 = vmatpush2.msra.mxu0 0.0
  %105 = vmatprep.subr.mxu0 0.0
  %106 = vmatpush2.msra.mxu0 0.0
  %107 = vmatprep.subr.mxu0 0.0
  %108 = vmatpush2.msra.mxu0 0.0
  %109 = vmatprep.subr.mxu0 0.0
  %110 = vmatpush2.msra.mxu0 0.0
  %111 = vmatprep.subr.mxu0 0.0
  %112 = vmatpush2.msra.mxu0 0.0
  %113 = vmatprep.subr.mxu0 0.0
  %114 = vmatpush2.msra.mxu0 0.0
  %115 = vmatprep.subr.mxu0 0.0
  %116 = vmatpush2.msra.mxu0 0.0
  %117 = vmatprep.subr.mxu0 0.0
  %118 = vmatpush2.msra.mxu0 0.0
  %119 = vmatprep.subr.mxu0 0.0
  %120 = vmatpush2.msra.mxu0 0.0
  %121 = vmatprep.subr.mxu0 0.0
  %122 = vmatpush2.msra.mxu0 0.0
  %123 = vmatprep.mubr.f32.mxu0 0.0
  %124 = vmatmul.mubr.f32.gmra.mxu0 %v36
  %v125 = vpop.f32.mrf.mxu0
  %v126 = vadd.f32 %v32, %v125
  %v127 = vpop.f32.mrf.mxu0
  %128 = vmatprep.mubr.f32.mxu0 0.0
  %129 = vmatmul.mubr.f32.gmra.mxu0 %v39
  %v130 = vpop.f32.mrf.mxu0
  %v131 = vadd.f32 %v32, %v130
  %v132 = vpop.f32.mrf.mxu0
  %133 = vmatprep.mubr.f32.mxu0 0.0
  %134 = vmatmul.mubr.f32.gmra.mxu0 %v42
  %v135 = vpop.f32.mrf.mxu0
  %v136 = vadd.f32 %v32, %v135
  %v137 = vpop.f32.mrf.mxu0
  %138 = vmatprep.mubr.f32.mxu0 0.0
  %139 = vmatmul.mubr.f32.gmra.mxu0 %v45
  %v140 = vpop.f32.mrf.mxu0
  %v141 = vadd.f32 %v32, %v140
  %v142 = vpop.f32.mrf.mxu0
  %143 = vmatprep.mubr.f32.mxu0 0.0
  %144 = vmatmul.mubr.f32.gmra.mxu0 %v48
  %v145 = vpop.f32.mrf.mxu0
  %v146 = vadd.f32 %v32, %v145
  %v147 = vpop.f32.mrf.mxu0
  %148 = vmatprep.mubr.f32.mxu0 0.0
  %149 = vmatmul.mubr.f32.gmra.mxu0 %v51
  %v150 = vpop.f32.mrf.mxu0
  %v151 = vadd.f32 %v32, %v150
  %v152 = vpop.f32.mrf.mxu0
  %153 = vmatprep.mubr.f32.mxu0 0.0
  %154 = vmatmul.mubr.f32.gmra.mxu0 %v54
  %v155 = vpop.f32.mrf.mxu0
  %v156 = vadd.f32 %v32, %v155
  %v157 = vpop.f32.mrf.mxu0
  %158 = vmatprep.mubr.f32.mxu0 0.0
  %159 = vmatmul.mubr.f32.gmra.mxu0 %v57
  %v160 = vpop.f32.mrf.mxu0
  %v161 = vadd.f32 %v32, %v160
  %v162 = vpop.f32.mrf.mxu0
  %163 = vdwg.mxu0
  %v164 = vadd.f32 %v126, %v17
  %v165 = vadd.f32 %v131, %v18
  %v166 = vadd.f32 %v136, %v19
  %v167 = vadd.f32 %v141, %v20
  %v168 = vadd.f32 %v146, %v21
  %v169 = vadd.f32 %v151, %v22
  %v170 = vadd.f32 %v156, %v23
  %v171 = vadd.f32 %v161, %v24
  %vm172 = vcmp.ge.f32.partialorder %v164, 0.0
  %vm173 = vcmp.ge.f32.partialorder %v165, 0.0
  %vm174 = vcmp.ge.f32.partialorder %v166, 0.0
  %vm175 = vcmp.ge.f32.partialorder %v167, 0.0
  %vm176 = vcmp.ge.f32.partialorder %v168, 0.0
  %vm177 = vcmp.ge.f32.partialorder %v169, 0.0
  %vm178 = vcmp.ge.f32.partialorder %v170, 0.0
  %vm179 = vcmp.ge.f32.partialorder %v171, 0.0
  %v180 = vmul.f32 %v164, 0.2
  %v181 = vmul.f32 %v165, 0.2
  %v182 = vmul.f32 %v166, 0.2
  %v183 = vmul.f32 %v167, 0.2
  %v184 = vmul.f32 %v168, 0.2
  %v185 = vmul.f32 %v169, 0.2
  %v186 = vmul.f32 %v170, 0.2
  %v187 = vmul.f32 %v171, 0.2
  %v188 = vsel %vm172, %v164, %v180
  %v189 = vsel %vm173, %v165, %v181
  %v190 = vsel %vm174, %v166, %v182
  %v191 = vsel %vm175, %v167, %v183
  %v192 = vsel %vm176, %v168, %v184
  %v193 = vsel %vm177, %v169, %v185
  %v194 = vsel %vm178, %v170, %v186
  %v195 = vsel %vm179, %v171, %v187
  %v196 = vld [vmem:[%s3] sm:$0xff]
  %v197 = vld [vmem:[%s3 + $0x8] sm:$0xff]
  %v198 = vld [vmem:[%s3 + $0x10] sm:$0xff]
  %v199 = vld [vmem:[%s3 + $0x18] sm:$0xff]
  %vm200 = vcmask 261120
  %v202 = vsel %vm200, %v196, 0
  %v205 = vsel %vm200, %v197, 0
  %v208 = vsel %vm200, %v198, 0
  %v211 = vsel %vm200, %v199, 0
  %213 = vmatprep.subr.mxu0 0.0
  %214 = vmatpush1.msra.mxu0 0.0
  %215 = vmatprep.subr.mxu0 0.0
  %216 = vmatpush1.msra.mxu0 0.0
  %217 = vmatprep.subr.mxu0 0.0
  %218 = vmatpush1.msra.mxu0 0.0
  %219 = vmatprep.subr.mxu0 0.0
  %220 = vmatpush1.msra.mxu0 0.0
  %221 = vmatprep.subr.mxu0 0.0
  %222 = vmatpush1.msra.mxu0 0.0
  %223 = vmatprep.subr.mxu0 0.0
  %224 = vmatpush1.msra.mxu0 0.0
  %225 = vmatprep.subr.mxu0 0.0
  %226 = vmatpush1.msra.mxu0 0.0
  %227 = vmatprep.subr.mxu0 0.0
  %228 = vmatpush1.msra.mxu0 0.0
  %229 = vmatprep.subr.mxu0 0.0
  %230 = vmatpush1.msra.mxu0 0.0
  %231 = vmatprep.subr.mxu0 0.0
  %232 = vmatpush1.msra.mxu0 0.0
  %233 = vmatprep.subr.mxu0 0.0
  %234 = vmatpush1.msra.mxu0 0.0
  %235 = vmatprep.subr.mxu0 0.0
  %236 = vmatpush1.msra.mxu0 0.0
  %237 = vmatprep.subr.mxu0 0.0
  %238 = vmatpush1.msra.mxu0 %v191
  %239 = vmatprep.subr.mxu0 0.0
  %240 = vmatpush1.msra.mxu0 %v190
  %241 = vmatprep.subr.mxu0 0.0
  %242 = vmatpush1.msra.mxu0 %v189
  %243 = vmatprep.subr.mxu0 0.0
  %244 = vmatpush1.msra.mxu0 %v188
  %245 = vmatprep.subr.mxu0 0.0
  %246 = vmatpush2.msra.mxu0 0.0
  %247 = vmatprep.subr.mxu0 0.0
  %248 = vmatpush2.msra.mxu0 0.0
  %249 = vmatprep.subr.mxu0 0.0
  %250 = vmatpush2.msra.mxu0 0.0
  %251 = vmatprep.subr.mxu0 0.0
  %252 = vmatpush2.msra.mxu0 0.0
  %253 = vmatprep.subr.mxu0 0.0
  %254 = vmatpush2.msra.mxu0 0.0
  %255 = vmatprep.subr.mxu0 0.0
  %256 = vmatpush2.msra.mxu0 0.0
  %257 = vmatprep.subr.mxu0 0.0
  %258 = vmatpush2.msra.mxu0 0.0
  %259 = vmatprep.subr.mxu0 0.0
  %260 = vmatpush2.msra.mxu0 0.0
  %261 = vmatprep.subr.mxu0 0.0
  %262 = vmatpush2.msra.mxu0 0.0
  %263 = vmatprep.subr.mxu0 0.0
  %264 = vmatpush2.msra.mxu0 0.0
  %265 = vmatprep.subr.mxu0 0.0
  %266 = vmatpush2.msra.mxu0 0.0
  %267 = vmatprep.subr.mxu0 0.0
  %268 = vmatpush2.msra.mxu0 0.0
  %269 = vmatprep.subr.mxu0 0.0
  %270 = vmatpush2.msra.mxu0 0.0
  %271 = vmatprep.subr.mxu0 0.0
  %272 = vmatpush2.msra.mxu0 0.0
  %273 = vmatprep.subr.mxu0 0.0
  %274 = vmatpush2.msra.mxu0 0.0
  %275 = vmatprep.subr.mxu0 0.0
  %276 = vmatpush2.msra.mxu0 0.0
  %277 = vmatprep.mubr.f32.mxu0 0.0
  %278 = vmatmul.mubr.f32.gmra.mxu0 %v202
  %v279 = vpop.f32.mrf.mxu0
  %v280 = vadd.f32 0.0, %v279
  %v281 = vpop.f32.mrf.mxu0
  %282 = vmatprep.mubr.f32.mxu0 0.0
  %283 = vmatmul.mubr.f32.gmra.mxu0 %v205
  %v284 = vpop.f32.mrf.mxu0
  %v285 = vadd.f32 0.0, %v284
  %v286 = vpop.f32.mrf.mxu0
  %287 = vmatprep.mubr.f32.mxu0 0.0
  %288 = vmatmul.mubr.f32.gmra.mxu0 %v208
  %v289 = vpop.f32.mrf.mxu0
  %v290 = vadd.f32 0.0, %v289
  %v291 = vpop.f32.mrf.mxu0
  %292 = vmatprep.mubr.f32.mxu0 0.0
  %293 = vmatmul.mubr.f32.gmra.mxu0 %v211
  %v294 = vpop.f32.mrf.mxu0
  %v295 = vadd.f32 0.0, %v294
  %v296 = vpop.f32.mrf.mxu0
  %297 = vdwg.mxu0
  %298 = vst.msk [vmem:[%s4] sm:$0xff] %vm34, %v280
  %299 = vst.msk [vmem:[%s4 + $0x8] sm:$0xff] %vm34, %v285
  %300 = vst.msk [vmem:[%s4 + $0x10] sm:$0xff] %vm34, %v290
  %301 = vst.msk [vmem:[%s4 + $0x18] sm:$0xff] %vm34, %v295
  %302 = vmatprep.subr.mxu0 0.0
  %303 = vmatpush1.msra.mxu0 0.0
  %304 = vmatprep.subr.mxu0 0.0
  %305 = vmatpush1.msra.mxu0 0.0
  %306 = vmatprep.subr.mxu0 0.0
  %307 = vmatpush1.msra.mxu0 0.0
  %308 = vmatprep.subr.mxu0 0.0
  %309 = vmatpush1.msra.mxu0 0.0
  %310 = vmatprep.subr.mxu0 0.0
  %311 = vmatpush1.msra.mxu0 0.0
  %312 = vmatprep.subr.mxu0 0.0
  %313 = vmatpush1.msra.mxu0 0.0
  %314 = vmatprep.subr.mxu0 0.0
  %315 = vmatpush1.msra.mxu0 0.0
  %316 = vmatprep.subr.mxu0 0.0
  %317 = vmatpush1.msra.mxu0 0.0
  %318 = vmatprep.subr.mxu0 0.0
  %319 = vmatpush1.msra.mxu0 0.0
  %320 = vmatprep.subr.mxu0 0.0
  %321 = vmatpush1.msra.mxu0 0.0
  %322 = vmatprep.subr.mxu0 0.0
  %323 = vmatpush1.msra.mxu0 0.0
  %324 = vmatprep.subr.mxu0 0.0
  %325 = vmatpush1.msra.mxu0 0.0
  %326 = vmatprep.subr.mxu0 0.0
  %327 = vmatpush1.msra.mxu0 %v195
  %328 = vmatprep.subr.mxu0 0.0
  %329 = vmatpush1.msra.mxu0 %v194
  %330 = vmatprep.subr.mxu0 0.0
  %331 = vmatpush1.msra.mxu0 %v193
  %332 = vmatprep.subr.mxu0 0.0
  %333 = vmatpush1.msra.mxu0 %v192
  %334 = vmatprep.subr.mxu0 0.0
  %335 = vmatpush2.msra.mxu0 0.0
  %336 = vmatprep.subr.mxu0 0.0
  %337 = vmatpush2.msra.mxu0 0.0
  %338 = vmatprep.subr.mxu0 0.0
  %339 = vmatpush2.msra.mxu0 0.0
  %340 = vmatprep.subr.mxu0 0.0
  %341 = vmatpush2.msra.mxu0 0.0
  %342 = vmatprep.subr.mxu0 0.0
  %343 = vmatpush2.msra.mxu0 0.0
  %344 = vmatprep.subr.mxu0 0.0
  %345 = vmatpush2.msra.mxu0 0.0
  %346 = vmatprep.subr.mxu0 0.0
  %347 = vmatpush2.msra.mxu0 0.0
  %348 = vmatprep.subr.mxu0 0.0
  %349 = vmatpush2.msra.mxu0 0.0
  %350 = vmatprep.subr.mxu0 0.0
  %351 = vmatpush2.msra.mxu0 0.0
  %352 = vmatprep.subr.mxu0 0.0
  %353 = vmatpush2.msra.mxu0 0.0
  %354 = vmatprep.subr.mxu0 0.0
  %355 = vmatpush2.msra.mxu0 0.0
  %356 = vmatprep.subr.mxu0 0.0
  %357 = vmatpush2.msra.mxu0 0.0
  %358 = vmatprep.subr.mxu0 0.0
  %359 = vmatpush2.msra.mxu0 0.0
  %360 = vmatprep.subr.mxu0 0.0
  %361 = vmatpush2.msra.mxu0 0.0
  %362 = vmatprep.subr.mxu0 0.0
  %363 = vmatpush2.msra.mxu0 0.0
  %364 = vmatprep.subr.mxu0 0.0
  %365 = vmatpush2.msra.mxu0 0.0
  %366 = vmatprep.mubr.f32.mxu0 0.0
  %367 = vmatmul.mubr.f32.gmra.mxu0 %v202
  %v368 = vpop.f32.mrf.mxu0
  %v369 = vadd.f32 0.0, %v368
  %v370 = vpop.f32.mrf.mxu0
  %371 = vmatprep.mubr.f32.mxu0 0.0
  %372 = vmatmul.mubr.f32.gmra.mxu0 %v205
  %v373 = vpop.f32.mrf.mxu0
  %v374 = vadd.f32 0.0, %v373
  %v375 = vpop.f32.mrf.mxu0
  %376 = vmatprep.mubr.f32.mxu0 0.0
  %377 = vmatmul.mubr.f32.gmra.mxu0 %v208
  %v378 = vpop.f32.mrf.mxu0
  %v379 = vadd.f32 0.0, %v378
  %v380 = vpop.f32.mrf.mxu0
  %381 = vmatprep.mubr.f32.mxu0 0.0
  %382 = vmatmul.mubr.f32.gmra.mxu0 %v211
  %v383 = vpop.f32.mrf.mxu0
  %v384 = vadd.f32 0.0, %v383
  %v385 = vpop.f32.mrf.mxu0
  %386 = vdwg.mxu0
  %s387 = scalar_lea.vmem %s4, 32
  %388 = vst.msk [vmem:[%s387] sm:$0xff] %vm34, %v369
  %389 = vst.msk [vmem:[%s387 + $0x8] sm:$0xff] %vm34, %v374
  %390 = vst.msk [vmem:[%s387 + $0x10] sm:$0xff] %vm34, %v379
  %391 = vst.msk [vmem:[%s387 + $0x18] sm:$0xff] %vm34, %v384
  // Predicated region
  $region18: #{gcn_forward.1} parent=0 // pred_check
    _
  $region19: #{gcn_forward.1} parent=0 // pred_check_branch
    %393 = sbr.rel (0) target = $region21
  $region20: #{gcn_forward.1} parent=0 // pred_region
    _
  $region21: #{gcn_forward.1} parent=0 // pred_fallthru
    _
  // Predicated region
  $region22: #{gcn_forward.1} parent=0 // pred_check
    _
  $region23: #{gcn_forward.1} parent=0 // pred_check_branch
    %395 = sbr.rel (0) target = $region25
  $region24: #{gcn_forward.1} parent=0 // pred_region
    _
  $region25: #{gcn_forward.1} parent=0 // pred_fallthru
    _

</llo_original>
